<compile_context>
chip_gen: v7x
topology: tpu7x:2x2x1
jax: 0.10.0
libtpu: 0.0.40
codegen_flags: <defaults>
</compile_context>

<pallas_src>
import jax
import jax.numpy as jnp
from jax.experimental import pallas as pl
from jax.experimental.pallas import tpu as pltpu  # noqa: F401  (TPU backend)


def _round_up(x, m):
    return ((x + m - 1) // m) * m


def _dqn_kernel(x_ref, w1_ref, b1_ref, w2_ref, b2_ref, o_ref):
    x = x_ref[...].astype(jnp.float32)        # (B, K)   K tiny (e.g. 4)
    w1 = w1_ref[...].astype(jnp.float32)      # (K, Hp)  Hp lane-dense (128)
    K = x.shape[1]

    # --- fc1 on the VPU: K broadcast-FMAs over a (B, Hp) lane-dense tile. ---
    # With K=4 an MXU pass would be pure latency (push + FIFO pop); four
    # broadcast multiply-adds finish in a handful of bundles instead.
    acc = x[:, 0:1] * w1[0:1, :]              # (B,1)*(1,Hp) -> (B,Hp)
    for k in range(1, K):                     # static unroll, K is tiny
        acc = acc + x[:, k:k+1] * w1[k:k+1, :]
    h = jnp.maximum(acc + b1_ref[...], 0.0)   # bias + ReLU in f32

    # --- fc2 on the MXU: (B, Hp) @ (Hp, Ap), lane-dense output. ---
    a = jnp.dot(h, w2_ref[...].astype(jnp.float32),
                preferred_element_type=jnp.float32)
    a = a + b2_ref[...]                       # (B, Ap) + (1, Ap)
    o_ref[...] = a.astype(o_ref.dtype)        # single downcast at the end


def dqn_forward(state, w1, b1, w2, b2):
    """state: (B, input_dims); w1: (input_dims, fc1_dims); b1: (fc1_dims,);
       w2: (fc1_dims, n_actions); b2: (n_actions,)  ->  (B, n_actions)"""
    B, K = state.shape
    H = w1.shape[1]
    A = w2.shape[1]

    Bp = _round_up(B, 8)        # sublane alignment
    Hp = _round_up(H, 128)      # lane-dense hidden dim
    Ap = _round_up(A, 128)      # lane-dense output dim

    # Zero-pad so padded hidden columns / output lanes stay inert and are
    # sliced away after the kernel.
    x_p = jnp.zeros((Bp, K), state.dtype).at[:B, :].set(state)
    w1_p = jnp.zeros((K, Hp), w1.dtype).at[:, :H].set(w1)
    b1_p = jnp.zeros((1, Hp), b1.dtype).at[0, :H].set(b1)
    w2_p = jnp.zeros((Hp, Ap), w2.dtype).at[:H, :A].set(w2)
    b2_p = jnp.zeros((1, Ap), b2.dtype).at[0, :A].set(b2)

    # Tiny problem: single grid point, full-array blocks (block_shape equal to
    # the full array satisfies the (8,128) rule).  Everything fits in VMEM on
    # v5e/v6e (128 MiB) and v7x (64 MiB) with huge margin at these shapes.
    out = pl.pallas_call(
        _dqn_kernel,
        out_shape=jax.ShapeDtypeStruct((Bp, Ap), state.dtype),
        in_specs=[
            pl.BlockSpec(x_p.shape, lambda: (0, 0)),
            pl.BlockSpec(w1_p.shape, lambda: (0, 0)),
            pl.BlockSpec(b1_p.shape, lambda: (0, 0)),
            pl.BlockSpec(w2_p.shape, lambda: (0, 0)),
            pl.BlockSpec(b2_p.shape, lambda: (0, 0)),
        ],
        out_specs=pl.BlockSpec((Bp, Ap), lambda: (0, 0)),
    )(x_p, w1_p, b1_p, w2_p, b2_p)

    return out[:B, :A]


def init_params(key, input_dims, fc1_dims, n_actions):
    # Deterministic init mimicking PyTorch Linear (uniform +/- 1/sqrt(fan_in)).
    k1, k2, k3, k4 = jax.random.split(key, 4)
    bound1 = 1.0 / jnp.sqrt(jnp.float32(input_dims))
    bound2 = 1.0 / jnp.sqrt(jnp.float32(fc1_dims))
    # PyTorch stores (out, in); we keep (in, out) for the kernel's x @ W.
    w1 = jax.random.uniform(k1, (input_dims, fc1_dims), jnp.float32, -bound1, bound1)
    b1 = jax.random.uniform(k2, (fc1_dims,), jnp.float32, -bound1, bound1)
    w2 = jax.random.uniform(k3, (fc1_dims, n_actions), jnp.float32, -bound2, bound2)
    b2 = jax.random.uniform(k4, (n_actions,), jnp.float32, -bound2, bound2)
    return w1, b1, w2, b2


if __name__ == "__main__":
    # Inverted pendulum: observation dim 4, small hidden layer, 2 actions.
    batch, input_dims, fc1_dims, n_actions = 8, 4, 32, 2

    key = jax.random.PRNGKey(0)
    k_state, k_params = jax.random.split(key)
    state = jax.random.normal(k_state, (batch, input_dims), jnp.float32)
    w1, b1, w2, b2 = init_params(k_params, input_dims, fc1_dims, n_actions)

    actions = dqn_forward(state, w1, b1, w2, b2)
    jax.block_until_ready(actions)

    # Pure-JAX reference check (same semantics as the PyTorch forward).
    ref = jnp.maximum(state @ w1 + b1, 0.0) @ w2 + b2
    assert actions.shape == (batch, n_actions)
    assert jnp.allclose(actions, ref, atol=1e-5, rtol=1e-5)

    print("KERNEL_OK")
</pallas_src>

<mosaic_0001>
module attributes {stable_mosaic.version = 11 : i64} {
  func.func @_dqn_kernel(%arg0: memref<8x4xf32, #tpu.memory_space<vmem>>, %arg1: memref<4x128xf32, #tpu.memory_space<vmem>>, %arg2: memref<1x128xf32, #tpu.memory_space<vmem>>, %arg3: memref<128x128xf32, #tpu.memory_space<vmem>>, %arg4: memref<1x128xf32, #tpu.memory_space<vmem>>, %arg5: memref<8x128xf32, #tpu.memory_space<vmem>>) attributes {dimension_semantics = [], scalar_prefetch = 0 : i64, scratch_operands = 0 : i64, tpu.core_type = #tpu.core_type<tc>} {
    %c0 = arith.constant 0 : index
    %c0_0 = arith.constant 0 : index
    %0 = vector.load %arg0[%c0, %c0_0] : memref<8x4xf32, #tpu.memory_space<vmem>>, vector<8x4xf32>
    %c0_1 = arith.constant 0 : index
    %c0_2 = arith.constant 0 : index
    %1 = vector.load %arg1[%c0_1, %c0_2] : memref<4x128xf32, #tpu.memory_space<vmem>>, vector<4x128xf32>
    %2 = vector.extract_strided_slice %0 {offsets = [0, 0], sizes = [8, 1], strides = [1, 1]} : vector<8x4xf32> to vector<8x1xf32>
    %3 = vector.extract_strided_slice %1 {offsets = [0, 0], sizes = [1, 128], strides = [1, 1]} : vector<4x128xf32> to vector<1x128xf32>
    %4 = vector.broadcast %2 : vector<8x1xf32> to vector<8x128xf32>
    %5 = vector.broadcast %3 : vector<1x128xf32> to vector<8x128xf32>
    %6 = arith.mulf %4, %5 : vector<8x128xf32>
    %7 = vector.extract_strided_slice %0 {offsets = [0, 1], sizes = [8, 1], strides = [1, 1]} : vector<8x4xf32> to vector<8x1xf32>
    %8 = vector.extract_strided_slice %1 {offsets = [1, 0], sizes = [1, 128], strides = [1, 1]} : vector<4x128xf32> to vector<1x128xf32>
    %9 = vector.broadcast %7 : vector<8x1xf32> to vector<8x128xf32>
    %10 = vector.broadcast %8 : vector<1x128xf32> to vector<8x128xf32>
    %11 = arith.mulf %9, %10 : vector<8x128xf32>
    %12 = arith.addf %6, %11 : vector<8x128xf32>
    %13 = vector.extract_strided_slice %0 {offsets = [0, 2], sizes = [8, 1], strides = [1, 1]} : vector<8x4xf32> to vector<8x1xf32>
    %14 = vector.extract_strided_slice %1 {offsets = [2, 0], sizes = [1, 128], strides = [1, 1]} : vector<4x128xf32> to vector<1x128xf32>
    %15 = vector.broadcast %13 : vector<8x1xf32> to vector<8x128xf32>
    %16 = vector.broadcast %14 : vector<1x128xf32> to vector<8x128xf32>
    %17 = arith.mulf %15, %16 : vector<8x128xf32>
    %18 = arith.addf %12, %17 : vector<8x128xf32>
    %19 = vector.extract_strided_slice %0 {offsets = [0, 3], sizes = [8, 1], strides = [1, 1]} : vector<8x4xf32> to vector<8x1xf32>
    %20 = vector.extract_strided_slice %1 {offsets = [3, 0], sizes = [1, 128], strides = [1, 1]} : vector<4x128xf32> to vector<1x128xf32>
    %21 = vector.broadcast %19 : vector<8x1xf32> to vector<8x128xf32>
    %22 = vector.broadcast %20 : vector<1x128xf32> to vector<8x128xf32>
    %23 = arith.mulf %21, %22 : vector<8x128xf32>
    %24 = arith.addf %18, %23 : vector<8x128xf32>
    %c0_3 = arith.constant 0 : index
    %c0_4 = arith.constant 0 : index
    %25 = vector.load %arg2[%c0_3, %c0_4] : memref<1x128xf32, #tpu.memory_space<vmem>>, vector<1x128xf32>
    %26 = vector.broadcast %25 : vector<1x128xf32> to vector<8x128xf32>
    %27 = arith.addf %24, %26 : vector<8x128xf32>
    %cst = arith.constant 0.000000e+00 : f32
    %28 = vector.broadcast %cst : f32 to vector<8x128xf32>
    %29 = arith.maximumf %27, %28 : vector<8x128xf32>
    %c0_5 = arith.constant 0 : index
    %c0_6 = arith.constant 0 : index
    %30 = vector.load %arg3[%c0_5, %c0_6] : memref<128x128xf32, #tpu.memory_space<vmem>>, vector<128x128xf32>
    %cst_7 = arith.constant dense<0.000000e+00> : vector<8x128xf32>
    %31 = tpu.matmul %29, %30, %cst_7 {dimension_numbers = #tpu.dot_dimension_numbers<[1], [0], [0], [1], [0, 0, 1, 1], [], []>} : vector<8x128xf32>, vector<128x128xf32>, vector<8x128xf32> -> vector<8x128xf32>
    %c0_8 = arith.constant 0 : index
    %c0_9 = arith.constant 0 : index
    %32 = vector.load %arg4[%c0_8, %c0_9] : memref<1x128xf32, #tpu.memory_space<vmem>>, vector<1x128xf32>
    %33 = vector.broadcast %32 : vector<1x128xf32> to vector<8x128xf32>
    %34 = arith.addf %31, %33 : vector<8x128xf32>
    %c0_10 = arith.constant 0 : index
    %c0_11 = arith.constant 0 : index
    %35 = vector.load %arg5[%c0_10, %c0_11] : memref<8x128xf32, #tpu.memory_space<vmem>>, vector<8x128xf32>
    tpu.vector_store %arg5[%c0_10, %c0_11], %34 {strides = array<i32>} : memref<8x128xf32, #tpu.memory_space<vmem>>, vector<8x128xf32>,
    return
  }
}

</mosaic_0001>

<llo_original>
// kernel: tpu_custom_call.1
$region0: #{tpu_custom_call.1}
  #allocation0 [shape = 'u32[]', space=smem, size = 0x4, offset = 0x4, fixed_abs, tag = 'smem constant byte address 0x4 - core index']
  #allocation1 [shape = 'u32[144,128]{1,0:T(1,128)}', space=vmem, size = 0x12000, scoped, tag = 'internal scratch']
  %s0 = inlined_call_operand.vmem [shape: f32[8,4], index: 0, kind: input, shape index: {}]
  %s1 = inlined_call_operand.vmem [shape: f32[4,128], index: 1, kind: input, shape index: {}]
  %s2 = inlined_call_operand.vmem [shape: f32[1,128], index: 2, kind: input, shape index: {}]
  %s3 = inlined_call_operand.hbm [shape: f32[128,128], index: 3, kind: input, shape index: {}]
  %s4 = inlined_call_operand.vmem [shape: f32[1,128], index: 4, kind: input, shape index: {}]
  %s5 = inlined_call_operand.hbm [shape: f32[8,128], index: 5, kind: output, shape index: {}]
  %s6 = sld [smem:[#allocation0]]
  $region34: #{tpu_custom_call.1} parent=0
    _
  %s8 = ssub.s32 1, %s6
  %s9 = scalar_select 0, %s8, %s6
  $region1: #{tpu_custom_call.1} parent=0
    #allocation2 [shape = 'u8[65536]{0}', space=vmem, size = 0x10000, scoped, tag = 'input window, operand 3, single buffered']
    #allocation3 [shape = 's32[1]{0}', space=sflag, size = 0x4, scoped, tag = 'scoped memory for tpu_custom_call.1']
    #allocation4 [shape = 's32[1]{0}', space=sflag, size = 0x4, scoped, tag = 'scoped memory for tpu_custom_call.1']
    #allocation5 [shape = 'u8[4096]{0}', space=vmem, size = 0x1000, scoped, tag = 'output window, operand 0, single buffered']
    %10 = vsyncpa [#allocation3], 0
    %11 = vsyncpa [#allocation4], 0
    // Predicated region
    $region2: #{tpu_custom_call.1} parent=1 // pred_check
      _
    $region3: #{tpu_custom_call.1} parent=1 // pred_check_branch
      %13 = sbr.rel (0) target = $region5
    $region4: #{tpu_custom_call.1} parent=1 // pred_region
      _
    $region5: #{tpu_custom_call.1} parent=1 // pred_fallthru
      _
    // Predicated region
    $region6: #{tpu_custom_call.1} parent=1 // pred_check
      _
    $region7: #{tpu_custom_call.1} parent=1 // pred_check_branch
      %15 = sbr.rel (0) target = $region9
    $region8: #{tpu_custom_call.1} parent=1 // pred_region
      _
    $region9: #{tpu_custom_call.1} parent=1 // pred_fallthru
      _
    // Predicated region
    $region10: #{tpu_custom_call.1} parent=1 // pred_check
      _
    $region11: #{tpu_custom_call.1} parent=1 // pred_check_branch
      %17 = sbr.rel (0) target = $region13
    $region12: #{tpu_custom_call.1} parent=1 // pred_region
      _
    $region13: #{tpu_custom_call.1} parent=1 // pred_fallthru
      _
    // Predicated region
    $region14: #{tpu_custom_call.1} parent=1 // pred_check
      _
    $region15: #{tpu_custom_call.1} parent=1 // pred_check_branch
      %19 = sbr.rel (0) target = $region17
    $region16: #{tpu_custom_call.1} parent=1 // pred_region
      %s21 = ssub.s32 2048, 2048
      %22 = vsyncadd [#allocation3], %s21
      %s23 = sshll.u32 [#allocation2], 4
      %s24 = int_to_ptr.vmem [resolvable:$true] %s23
      %29 = dma.hbm_to_vmem [thread:$0]  %s3, 2048, %s24, [#allocation3], 128, 128, 8
    $region17: #{tpu_custom_call.1} parent=1 // pred_fallthru
      _
    // Predicated region
    $region18: #{tpu_custom_call.1} parent=1 // pred_check
      _
    $region19: #{tpu_custom_call.1} parent=1 // pred_check_branch
      %31 = sbr.rel (0) target = $region21
    $region20: #{tpu_custom_call.1} parent=1 // pred_region
      _
    $region21: #{tpu_custom_call.1} parent=1 // pred_fallthru
      _
    // Predicated region
    $region22: #{tpu_custom_call.1} parent=1 // pred_check
      _
    $region23: #{tpu_custom_call.1} parent=1 // pred_check_branch
      %33 = sbr.rel (0) target = $region25
    $region24: #{tpu_custom_call.1} parent=1 // pred_region
      %34 = dma.done [#allocation3], 2048
    $region25: #{tpu_custom_call.1} parent=1 // pred_fallthru
      _
    %v35 = vld [vmem:[%s0] sm:$0xff]
    %v36 = vld [vmem:[%s1] sm:$0xf]
    %38 = vset.pattern.permute.xlu0 0
    %39 = vperm.xlu0 %38, %v35
    %v40 = vpop.permute.xlu0 %39
    %v42 = vlaneseq
    %v43 = vshrl.u32 %v42, 7
    %v44 = vsub.s32 0, %v43
    %v45 = vrot.slane %v36, %v44
    %v46 = vmul.f32 %v40, %v45
    %47 = vset.pattern.permute.xlu0 1
    %48 = vperm.xlu0 %47, %v35
    %v49 = vpop.permute.xlu0 %48
    %v51 = vlaneseq
    %v52 = vshrl.u32 %v51, 7
    %v53 = vsub.s32 1, %v52
    %v54 = vrot.slane %v36, %v53
    %v55 = vmul.f32 %v49, %v54
    %v56 = vadd.f32 %v46, %v55
    %57 = vset.pattern.permute.xlu0 2
    %58 = vperm.xlu0 %57, %v35
    %v59 = vpop.permute.xlu0 %58
    %v61 = vlaneseq
    %v62 = vshrl.u32 %v61, 7
    %v63 = vsub.s32 2, %v62
    %v64 = vrot.slane %v36, %v63
    %v65 = vmul.f32 %v59, %v64
    %v66 = vadd.f32 %v56, %v65
    %67 = vset.pattern.permute.xlu0 3
    %68 = vperm.xlu0 %67, %v35
    %v69 = vpop.permute.xlu0 %68
    %v71 = vlaneseq
    %v72 = vshrl.u32 %v71, 7
    %v73 = vsub.s32 3, %v72
    %v74 = vrot.slane %v36, %v73
    %v75 = vmul.f32 %v69, %v74
    %v76 = vadd.f32 %v66, %v75
    %v77 = vld [vmem:[%s2] sm:$0x1]
    %v79 = vlaneseq
    %v80 = vshrl.u32 %v79, 7
    %v81 = vsub.s32 0, %v80
    %v82 = vrot.slane %v77, %v81
    %v84 = vadd.f32 %v76, %v82
    %v85 = vmax.f32 %v84, 0.0
    %v86 = vld [vmem:[#allocation2] sm:$0xff]
    %v87 = vld [vmem:[#allocation2 + $0x8] sm:$0xff]
    %v88 = vld [vmem:[#allocation2 + $0x10] sm:$0xff]
    %v89 = vld [vmem:[#allocation2 + $0x18] sm:$0xff]
    %v90 = vld [vmem:[#allocation2 + $0x20] sm:$0xff]
    %v91 = vld [vmem:[#allocation2 + $0x28] sm:$0xff]
    %v92 = vld [vmem:[#allocation2 + $0x30] sm:$0xff]
    %v93 = vld [vmem:[#allocation2 + $0x38] sm:$0xff]
    %v94 = vld [vmem:[#allocation2 + $0x40] sm:$0xff]
    %v95 = vld [vmem:[#allocation2 + $0x48] sm:$0xff]
    %v96 = vld [vmem:[#allocation2 + $0x50] sm:$0xff]
    %v97 = vld [vmem:[#allocation2 + $0x58] sm:$0xff]
    %v98 = vld [vmem:[#allocation2 + $0x60] sm:$0xff]
    %v99 = vld [vmem:[#allocation2 + $0x68] sm:$0xff]
    %v100 = vld [vmem:[#allocation2 + $0x70] sm:$0xff]
    %v101 = vld [vmem:[#allocation2 + $0x78] sm:$0xff]
    %v102 = vld [vmem:[%s4] sm:$0x1]
    %v104 = vlaneseq
    %v105 = vshrl.u32 %v104, 7
    %v106 = vsub.s32 0, %v105
    %v107 = vrot.slane %v102, %v106
    %109 = vmatprep.subr.mxu0 0.0
    %110 = vmatpush1.msra.mxu0 %v86
    %111 = vmatprep.subr.mxu0 0.0
    %112 = vmatpush1.msra.mxu0 %v87
    %113 = vmatprep.subr.mxu0 0.0
    %114 = vmatpush1.msra.mxu0 %v88
    %115 = vmatprep.subr.mxu0 0.0
    %116 = vmatpush1.msra.mxu0 %v89
    %117 = vmatprep.subr.mxu0 0.0
    %118 = vmatpush1.msra.mxu0 %v90
    %119 = vmatprep.subr.mxu0 0.0
    %120 = vmatpush1.msra.mxu0 %v91
    %121 = vmatprep.subr.mxu0 0.0
    %122 = vmatpush1.msra.mxu0 %v92
    %123 = vmatprep.subr.mxu0 0.0
    %124 = vmatpush1.msra.mxu0 %v93
    %125 = vmatprep.subr.mxu0 0.0
    %126 = vmatpush1.msra.mxu0 %v94
    %127 = vmatprep.subr.mxu0 0.0
    %128 = vmatpush1.msra.mxu0 %v95
    %129 = vmatprep.subr.mxu0 0.0
    %130 = vmatpush1.msra.mxu0 %v96
    %131 = vmatprep.subr.mxu0 0.0
    %132 = vmatpush1.msra.mxu0 %v97
    %133 = vmatprep.subr.mxu0 0.0
    %134 = vmatpush1.msra.mxu0 %v98
    %135 = vmatprep.subr.mxu0 0.0
    %136 = vmatpush1.msra.mxu0 %v99
    %137 = vmatprep.subr.mxu0 0.0
    %138 = vmatpush1.msra.mxu0 %v100
    %139 = vmatprep.subr.mxu0 0.0
    %140 = vmatpush1.msra.mxu0 %v101
    %141 = vmatprep.subr.mxu0 0.0
    %142 = vmatpush1.msra.mxu0 0.0
    %143 = vmatprep.subr.mxu0 0.0
    %144 = vmatpush1.msra.mxu0 0.0
    %145 = vmatprep.subr.mxu0 0.0
    %146 = vmatpush1.msra.mxu0 0.0
    %147 = vmatprep.subr.mxu0 0.0
    %148 = vmatpush1.msra.mxu0 0.0
    %149 = vmatprep.subr.mxu0 0.0
    %150 = vmatpush1.msra.mxu0 0.0
    %151 = vmatprep.subr.mxu0 0.0
    %152 = vmatpush1.msra.mxu0 0.0
    %153 = vmatprep.subr.mxu0 0.0
    %154 = vmatpush1.msra.mxu0 0.0
    %155 = vmatprep.subr.mxu0 0.0
    %156 = vmatpush1.msra.mxu0 0.0
    %157 = vmatprep.subr.mxu0 0.0
    %158 = vmatpush1.msra.mxu0 0.0
    %159 = vmatprep.subr.mxu0 0.0
    %160 = vmatpush1.msra.mxu0 0.0
    %161 = vmatprep.subr.mxu0 0.0
    %162 = vmatpush1.msra.mxu0 0.0
    %163 = vmatprep.subr.mxu0 0.0
    %164 = vmatpush1.msra.mxu0 0.0
    %165 = vmatprep.subr.mxu0 0.0
    %166 = vmatpush1.msra.mxu0 0.0
    %167 = vmatprep.subr.mxu0 0.0
    %168 = vmatpush1.msra.mxu0 0.0
    %169 = vmatprep.subr.mxu0 0.0
    %170 = vmatpush1.msra.mxu0 0.0
    %171 = vmatprep.subr.mxu0 0.0
    %172 = vmatpush1.msra.mxu0 0.0
    %173 = vmatprep.mubr.f32.mxu0 0.0
    %174 = vmatmul.mubr.f32.gmra.mrb[0].mxu0 %v85
    %v175 = vpop.f32.mrb[0].mxu0
    %v176 = vadd.f32 %v107, %v175
    %v177 = vpop.f32.mrb[0].mxu0
    %178 = vdwg.mxu0
    %179 = vst [vmem:[#allocation5] sm:$0xff] %v176
    // Predicated region
    $region26: #{tpu_custom_call.1} parent=1 // pred_check
      _
    $region27: #{tpu_custom_call.1} parent=1 // pred_check_branch
      %181 = sbr.rel (0) target = $region29
    $region28: #{tpu_custom_call.1} parent=1 // pred_region
      %s183 = ssub.s32 128, 128
      %184 = vsyncadd [#allocation4], %s183
      %s186 = sshll.u32 [#allocation5], 4
      %s187 = int_to_ptr.vmem [resolvable:$true] %s186
      %189 = dma.vmem_to_hbm [thread:$0]  %s187, 128, %s5, [#allocation4]
    $region29: #{tpu_custom_call.1} parent=1 // pred_fallthru
      _
    // Predicated region
    $region30: #{tpu_custom_call.1} parent=1 // pred_check
      _
    $region31: #{tpu_custom_call.1} parent=1 // pred_check_branch
      %191 = sbr.rel (0) target = $region33
    $region32: #{tpu_custom_call.1} parent=1 // pred_region
      %192 = dma.done [#allocation4], 128
    $region33: #{tpu_custom_call.1} parent=1 // pred_fallthru
      _
    %193 = vsyncpa [#allocation3], 1
    %194 = vsyncpa [#allocation4], 1

</llo_original>
